<compile_context>
chip_gen: v7x
topology: tpu7x:2x2x1
jax: 0.10.0
libtpu: 0.0.40
codegen_flags: <defaults>
</compile_context>

<pallas_src>
import jax
import jax.numpy as jnp
import numpy as np
from jax.experimental import pallas as pl
from jax.experimental.pallas import tpu as pltpu


def _softplus(x):
    # numerically stable softplus, matches F.softplus default
    return jnp.maximum(x, 0.0) + jnp.log1p(jnp.exp(-jnp.abs(x)))


def _mlp_kernel(x_ref, p_ref, o_ref):
    # x_ref : (2, TB)   batch on lanes
    # p_ref : (32, 17)  packed params:
    #         rows  0:16 -> [W1 (16,2) | b1]
    #         rows 16:24 -> [W2 (8,16) | b2]
    #         row  24    -> [W3 (1,8)  | b3]
    # o_ref : (1, TB)
    x = x_ref[...]

    w1 = p_ref[0:16, 0:2]     # (16, 2)
    b1 = p_ref[0:16, 2:3]     # (16, 1)
    w2 = p_ref[16:24, 0:16]   # (8, 16)
    b2 = p_ref[16:24, 16:17]  # (8, 1)
    w3 = p_ref[24:25, 0:8]    # (1, 8)
    b3 = p_ref[24:25, 8:9]    # (1, 1)

    # layer 1: (16,2)@(2,TB) + b1   -- MXU
    h1 = _softplus(jnp.dot(w1, x, preferred_element_type=jnp.float32) + b1)
    # layer 2: (8,16)@(16,TB) + b2  -- MXU (previously the VALU-bound loop)
    h2 = _softplus(jnp.dot(w2, h1, preferred_element_type=jnp.float32) + b2)
    # layer 3: (1,8)@(8,TB) + b3    -- MXU
    h3 = jnp.dot(w3, h2, preferred_element_type=jnp.float32) + b3

    # |2*sigmoid(h3) - 1| == |tanh(h3 / 2)|
    o_ref[...] = jnp.abs(jnp.tanh(0.5 * h3)).astype(o_ref.dtype)


def _pack_params(params):
    """Pack PyTorch-convention params into one (32, 17) grid-invariant constant."""
    W1 = params["W1"].astype(jnp.float32); b1 = params["b1"].astype(jnp.float32)
    W2 = params["W2"].astype(jnp.float32); b2 = params["b2"].astype(jnp.float32)
    W3 = params["W3"].astype(jnp.float32); b3 = params["b3"].astype(jnp.float32)
    P = jnp.zeros((32, 17), jnp.float32)
    P = P.at[0:16, 0:2].set(W1)
    P = P.at[0:16, 2].set(b1)
    P = P.at[16:24, 0:16].set(W2)
    P = P.at[16:24, 16].set(b2)
    P = P.at[24, 0:8].set(W3[0])
    P = P.at[24, 8].set(b3[0])
    return P


def exogenous_effect_forward(x, params, *, tb=8192):
    """x: (N, 2) float32. params: PyTorch convention W (out,in), b (out,)."""
    N = int(x.shape[0])
    assert x.shape[1] == 2, "input features must be 2"

    # lane tile: multiple of 128, no larger than needed for this N
    tb = max(128, 128 * pl.cdiv(int(tb), 128))
    tb = min(tb, 128 * pl.cdiv(N, 128))
    # v7x: keep >= 2 grid steps (one per TensorCore) when each half stays big
    half = 128 * pl.cdiv(pl.cdiv(N, 2), 128)
    if 4096 <= half < tb:
        tb = half
    grid = (pl.cdiv(N, tb),)

    # batch-on-lanes layout; no whole-array padding (Pallas masks the ragged tail)
    x_t = x.astype(jnp.float32).T          # (2, N)
    P = _pack_params(params)               # (32, 17)

    out = pl.pallas_call(
        _mlp_kernel,
        out_shape=jax.ShapeDtypeStruct((1, N), jnp.float32),
        grid=grid,
        in_specs=[
            pl.BlockSpec((2, tb), lambda i: (0, i)),      # lane-dense x tile
            pl.BlockSpec(P.shape, lambda i: (0, 0)),      # grid-invariant params
        ],
        out_specs=pl.BlockSpec((1, tb), lambda i: (0, i)),  # lane-dense output
        compiler_params=pltpu.CompilerParams(
            dimension_semantics=("parallel",),
        ),
        cost_estimate=pl.CostEstimate(
            flops=336 * N, transcendentals=49 * N, bytes_accessed=12 * N),
    )(x_t, P)

    return out[0].reshape(N, 1)


def init_params(key):
    """PyTorch Linear default init: U(-1/sqrt(fan_in), 1/sqrt(fan_in)); W is (out, in)."""
    ks = jax.random.split(key, 6)

    def lin(kw, kb, fan_in, fan_out):
        bound = 1.0 / jnp.sqrt(jnp.float32(fan_in))
        W = jax.random.uniform(kw, (fan_out, fan_in), jnp.float32, -bound, bound)
        b = jax.random.uniform(kb, (fan_out,), jnp.float32, -bound, bound)
        return W, b

    W1, b1 = lin(ks[0], ks[1], 2, 16)
    W2, b2 = lin(ks[2], ks[3], 16, 8)
    W3, b3 = lin(ks[4], ks[5], 8, 1)
    return {"W1": W1, "b1": b1, "W2": W2, "b2": b2, "W3": W3, "b3": b3}


def _reference_np(x, p):
    """Exact host-side reference in float64 (independent of TPU matmul precision)."""
    x = np.asarray(x, np.float64)
    W1 = np.asarray(p["W1"], np.float64); b1 = np.asarray(p["b1"], np.float64)
    W2 = np.asarray(p["W2"], np.float64); b2 = np.asarray(p["b2"], np.float64)
    W3 = np.asarray(p["W3"], np.float64); b3 = np.asarray(p["b3"], np.float64)

    def softplus(v):
        return np.maximum(v, 0.0) + np.log1p(np.exp(-np.abs(v)))

    h = softplus(x @ W1.T + b1)
    h = softplus(h @ W2.T + b2)
    h = h @ W3.T + b3
    return np.abs(2.0 / (1.0 + np.exp(-h)) - 1.0)


if __name__ == "__main__":
    key = jax.random.PRNGKey(0)
    kx1, kx2, kp = jax.random.split(key, 3)
    params = init_params(kp)

    # small batch: single tile, masked ragged store (8 of 128 lanes)
    N = 8
    x = jax.random.normal(kx1, (N, 2), jnp.float32)
    out = jax.block_until_ready(exogenous_effect_forward(x, params))
    ref = _reference_np(x, params)
    assert out.shape == (N, 1)
    assert np.allclose(np.asarray(out), ref, atol=1e-4, rtol=1e-4), "mismatch (N=8)"

    # ragged batch: default tiling (single ragged block) and forced multi-block grid
    N2 = 300
    x2 = jax.random.normal(kx2, (N2, 2), jnp.float32)
    ref2 = _reference_np(x2, params)
    out2 = jax.block_until_ready(exogenous_effect_forward(x2, params))
    out3 = jax.block_until_ready(exogenous_effect_forward(x2, params, tb=128))
    assert out2.shape == (N2, 1) and out3.shape == (N2, 1)
    assert np.allclose(np.asarray(out2), ref2, atol=1e-4, rtol=1e-4), "mismatch (N=300)"
    assert np.allclose(np.asarray(out3), ref2, atol=1e-4, rtol=1e-4), "mismatch (N=300, tb=128)"

    print("KERNEL_OK")
</pallas_src>

<mosaic_0001>
module attributes {stable_mosaic.version = 11 : i64} {
  func.func @_mlp_kernel(%arg0: i32, %arg1: memref<2x128xf32, #tpu.memory_space<vmem>>, %arg2: memref<32x17xf32, #tpu.memory_space<vmem>>, %arg3: memref<1x128xf32, #tpu.memory_space<vmem>>) attributes {dimension_semantics = [#tpu.dimension_semantics<parallel>], iteration_bounds = array<i64: 1>, scalar_prefetch = 0 : i64, scratch_operands = 0 : i64, tpu.core_type = #tpu.core_type<tc>, window_params = [{transform_indices = @transform_0, window_bounds = array<i64: 2, 128>}, {pipeline_mode = #tpu.pipeline_mode<synchronous>, transform_indices = @transform_1, window_bounds = array<i64: 32, 17>}, {transform_indices = @transform_2, window_bounds = array<i64: 1, 128>}]} {
    %c0 = arith.constant 0 : index
    %c0_0 = arith.constant 0 : index
    %0 = vector.load %arg1[%c0, %c0_0] : memref<2x128xf32, #tpu.memory_space<vmem>>, vector<2x128xf32>
    %c0_1 = arith.constant 0 : index
    %c0_2 = arith.constant 0 : index
    %1 = vector.load %arg2[%c0_1, %c0_2] : memref<32x17xf32, #tpu.memory_space<vmem>>, vector<16x2xf32>
    %c0_3 = arith.constant 0 : index
    %c2 = arith.constant 2 : index
    %2 = vector.load %arg2[%c0_3, %c2] : memref<32x17xf32, #tpu.memory_space<vmem>>, vector<16x1xf32>
    %c16 = arith.constant 16 : index
    %c0_4 = arith.constant 0 : index
    %3 = vector.load %arg2[%c16, %c0_4] : memref<32x17xf32, #tpu.memory_space<vmem>>, vector<8x16xf32>
    %c16_5 = arith.constant 16 : index
    %c16_6 = arith.constant 16 : index
    %4 = vector.load %arg2[%c16_5, %c16_6] : memref<32x17xf32, #tpu.memory_space<vmem>>, vector<8x1xf32>
    %c24 = arith.constant 24 : index
    %c0_7 = arith.constant 0 : index
    %5 = vector.load %arg2[%c24, %c0_7] : memref<32x17xf32, #tpu.memory_space<vmem>>, vector<1x8xf32>
    %c24_8 = arith.constant 24 : index
    %c8 = arith.constant 8 : index
    %6 = vector.load %arg2[%c24_8, %c8] : memref<32x17xf32, #tpu.memory_space<vmem>>, vector<1x1xf32>
    %cst = arith.constant dense<0.000000e+00> : vector<16x128xf32>
    %7 = tpu.matmul %1, %0, %cst {dimension_numbers = #tpu.dot_dimension_numbers<[1], [0], [0], [1], [0, 0, 1, 1], [], []>} : vector<16x2xf32>, vector<2x128xf32>, vector<16x128xf32> -> vector<16x128xf32>
    %8 = vector.broadcast %2 : vector<16x1xf32> to vector<16x128xf32>
    %9 = arith.addf %7, %8 : vector<16x128xf32>
    %cst_9 = arith.constant 0.000000e+00 : f32
    %10 = vector.broadcast %cst_9 : f32 to vector<16x128xf32>
    %11 = arith.maximumf %9, %10 : vector<16x128xf32>
    %12 = math.absf %9 : vector<16x128xf32>
    %cst_10 = arith.constant 0.000000e+00 : f32
    %13 = vector.broadcast %cst_10 : f32 to vector<16x128xf32>
    %14 = arith.subf %13, %12 : vector<16x128xf32>
    %15 = math.exp %14 : vector<16x128xf32>
    %16 = math.log1p %15 : vector<16x128xf32>
    %17 = arith.addf %11, %16 : vector<16x128xf32>
    %cst_11 = arith.constant dense<0.000000e+00> : vector<8x128xf32>
    %18 = tpu.matmul %3, %17, %cst_11 {dimension_numbers = #tpu.dot_dimension_numbers<[1], [0], [0], [1], [0, 0, 1, 1], [], []>} : vector<8x16xf32>, vector<16x128xf32>, vector<8x128xf32> -> vector<8x128xf32>
    %19 = vector.broadcast %4 : vector<8x1xf32> to vector<8x128xf32>
    %20 = arith.addf %18, %19 : vector<8x128xf32>
    %cst_12 = arith.constant 0.000000e+00 : f32
    %21 = vector.broadcast %cst_12 : f32 to vector<8x128xf32>
    %22 = arith.maximumf %20, %21 : vector<8x128xf32>
    %23 = math.absf %20 : vector<8x128xf32>
    %cst_13 = arith.constant 0.000000e+00 : f32
    %24 = vector.broadcast %cst_13 : f32 to vector<8x128xf32>
    %25 = arith.subf %24, %23 : vector<8x128xf32>
    %26 = math.exp %25 : vector<8x128xf32>
    %27 = math.log1p %26 : vector<8x128xf32>
    %28 = arith.addf %22, %27 : vector<8x128xf32>
    %cst_14 = arith.constant dense<0.000000e+00> : vector<1x128xf32>
    %29 = tpu.matmul %5, %28, %cst_14 {dimension_numbers = #tpu.dot_dimension_numbers<[1], [0], [0], [1], [0, 0, 1, 1], [], []>} : vector<1x8xf32>, vector<8x128xf32>, vector<1x128xf32> -> vector<1x128xf32>
    %30 = vector.broadcast %6 : vector<1x1xf32> to vector<1x128xf32>
    %31 = arith.addf %29, %30 : vector<1x128xf32>
    %cst_15 = arith.constant 5.000000e-01 : f32
    %32 = vector.broadcast %cst_15 : f32 to vector<1x128xf32>
    %33 = arith.mulf %32, %31 : vector<1x128xf32>
    %34 = math.tanh %33 : vector<1x128xf32>
    %35 = math.absf %34 : vector<1x128xf32>
    %c0_16 = arith.constant 0 : index
    %c0_17 = arith.constant 0 : index
    %36 = vector.load %arg3[%c0_16, %c0_17] : memref<1x128xf32, #tpu.memory_space<vmem>>, vector<1x128xf32>
    tpu.vector_store %arg3[%c0_16, %c0_17], %35 {strides = array<i32>} : memref<1x128xf32, #tpu.memory_space<vmem>>, vector<1x128xf32>,
    return
  }
  func.func @transform_0(%arg0: i32) -> (i32, i32) {
    %c0_i32 = arith.constant 0 : i32
    %c0_i32_0 = arith.constant 0 : i32
    return %c0_i32, %arg0 : i32, i32
  }
  func.func @transform_1(%arg0: i32) -> (i32, i32) {
    %c0_i32 = arith.constant 0 : i32
    %c0_i32_0 = arith.constant 0 : i32
    %c0_i32_1 = arith.constant 0 : i32
    return %c0_i32, %c0_i32_0 : i32, i32
  }
  func.func @transform_2(%arg0: i32) -> (i32, i32) {
    %c0_i32 = arith.constant 0 : i32
    %c0_i32_0 = arith.constant 0 : i32
    return %c0_i32, %arg0 : i32, i32
  }
}

</mosaic_0001>

<llo_original>
// kernel: tpu_custom_call.1
$region0: #{tpu_custom_call.1}
  #allocation0 [shape = 'u32[]', space=smem, size = 0x4, offset = 0x4, fixed_abs, tag = 'smem constant byte address 0x4 - core index']
  #allocation1 [shape = 'u32[144,128]{1,0:T(1,128)}', space=vmem, size = 0x12000, scoped, tag = 'internal scratch']
  %s0 = inlined_call_operand.vmem [shape: f32[2,8], index: 0, kind: input, shape index: {}]
  %s1 = inlined_call_operand.vmem [shape: f32[32,17], index: 1, kind: input, shape index: {}]
  %s2 = inlined_call_operand.hbm [shape: f32[1,8], index: 2, kind: output, shape index: {}]
  %s3 = sld [smem:[#allocation0]]
  $region18: #{tpu_custom_call.1} parent=0
    _
  %s5 = ssub.s32 1, %s3
  %s6 = scalar_select 0, %s5, %s3
  $region1: #{tpu_custom_call.1} parent=0
    #allocation2 [shape = 'u8[512]{0}', space=vmem, size = 0x400, scoped, tag = 'output window, operand 0, single buffered']
    #allocation3 [shape = 's32[1]{0}', space=sflag, size = 0x4, scoped, tag = 'scoped memory for tpu_custom_call.1']
    %7 = vsyncpa [#allocation3], 0
    // Predicated region
    $region2: #{tpu_custom_call.1} parent=1 // pred_check
      _
    $region3: #{tpu_custom_call.1} parent=1 // pred_check_branch
      %9 = sbr.rel (0) target = $region5
    $region4: #{tpu_custom_call.1} parent=1 // pred_region
      _
    $region5: #{tpu_custom_call.1} parent=1 // pred_fallthru
      _
    // Predicated region
    $region6: #{tpu_custom_call.1} parent=1 // pred_check
      _
    $region7: #{tpu_custom_call.1} parent=1 // pred_check_branch
      %11 = sbr.rel (0) target = $region9
    $region8: #{tpu_custom_call.1} parent=1 // pred_region
      _
    $region9: #{tpu_custom_call.1} parent=1 // pred_fallthru
      _
    %v12 = vld [vmem:[%s0] sm:$0x3]
    %v13 = vld [vmem:[%s1] sm:$0xff]
    %v14 = vld [vmem:[%s1 + $0x8] sm:$0xff]
    %v15 = vld [vmem:[%s1 + $0x10] sm:$0xff]
    %v16 = vld [vmem:[%s1 + $0x18] sm:$0x1]
    %18 = vset.pattern.permute.xlu0 2
    %19 = vperm.xlu0 %18, %v13
    %v20 = vpop.permute.xlu0 %19
    %23 = vset.pattern.permute.xlu0 2
    %24 = vperm.xlu0 %23, %v14
    %v25 = vpop.permute.xlu0 %24
    %vm27 = vcmask 15360
    %v28 = vsel %vm27, %v13, 0
    %v30 = vsel %vm27, %v14, 0
    %vm32 = vcmask 1041408
    %v34 = vsel %vm32, %v12, 0
    %36 = vmatprep.subr.mxu0 0.0
    %37 = vmatpush1.msra.mxu0 %v34
    %38 = vmatprep.subr.mxu0 0.0
    %39 = vmatpush1.msra.mxu0 0.0
    %40 = vmatprep.subr.mxu0 0.0
    %41 = vmatpush1.msra.mxu0 0.0
    %42 = vmatprep.subr.mxu0 0.0
    %43 = vmatpush1.msra.mxu0 0.0
    %44 = vmatprep.subr.mxu0 0.0
    %45 = vmatpush1.msra.mxu0 0.0
    %46 = vmatprep.subr.mxu0 0.0
    %47 = vmatpush1.msra.mxu0 0.0
    %48 = vmatprep.subr.mxu0 0.0
    %49 = vmatpush1.msra.mxu0 0.0
    %50 = vmatprep.subr.mxu0 0.0
    %51 = vmatpush1.msra.mxu0 0.0
    %52 = vmatprep.subr.mxu0 0.0
    %53 = vmatpush1.msra.mxu0 0.0
    %54 = vmatprep.subr.mxu0 0.0
    %55 = vmatpush1.msra.mxu0 0.0
    %56 = vmatprep.subr.mxu0 0.0
    %57 = vmatpush1.msra.mxu0 0.0
    %58 = vmatprep.subr.mxu0 0.0
    %59 = vmatpush1.msra.mxu0 0.0
    %60 = vmatprep.subr.mxu0 0.0
    %61 = vmatpush1.msra.mxu0 0.0
    %62 = vmatprep.subr.mxu0 0.0
    %63 = vmatpush1.msra.mxu0 0.0
    %64 = vmatprep.subr.mxu0 0.0
    %65 = vmatpush1.msra.mxu0 0.0
    %66 = vmatprep.subr.mxu0 0.0
    %67 = vmatpush1.msra.mxu0 0.0
    %68 = vmatprep.subr.mxu0 0.0
    %69 = vmatpush1.msra.mxu0 0.0
    %70 = vmatprep.subr.mxu0 0.0
    %71 = vmatpush1.msra.mxu0 0.0
    %72 = vmatprep.subr.mxu0 0.0
    %73 = vmatpush1.msra.mxu0 0.0
    %74 = vmatprep.subr.mxu0 0.0
    %75 = vmatpush1.msra.mxu0 0.0
    %76 = vmatprep.subr.mxu0 0.0
    %77 = vmatpush1.msra.mxu0 0.0
    %78 = vmatprep.subr.mxu0 0.0
    %79 = vmatpush1.msra.mxu0 0.0
    %80 = vmatprep.subr.mxu0 0.0
    %81 = vmatpush1.msra.mxu0 0.0
    %82 = vmatprep.subr.mxu0 0.0
    %83 = vmatpush1.msra.mxu0 0.0
    %84 = vmatprep.subr.mxu0 0.0
    %85 = vmatpush1.msra.mxu0 0.0
    %86 = vmatprep.subr.mxu0 0.0
    %87 = vmatpush1.msra.mxu0 0.0
    %88 = vmatprep.subr.mxu0 0.0
    %89 = vmatpush1.msra.mxu0 0.0
    %90 = vmatprep.subr.mxu0 0.0
    %91 = vmatpush1.msra.mxu0 0.0
    %92 = vmatprep.subr.mxu0 0.0
    %93 = vmatpush1.msra.mxu0 0.0
    %94 = vmatprep.subr.mxu0 0.0
    %95 = vmatpush1.msra.mxu0 0.0
    %96 = vmatprep.subr.mxu0 0.0
    %97 = vmatpush1.msra.mxu0 0.0
    %98 = vmatprep.subr.mxu0 0.0
    %99 = vmatpush1.msra.mxu0 0.0
    %100 = vmatprep.mubr.f32.mxu0 0.0
    %101 = vmatmul.mubr.f32.gmra.mrb[0].mxu0 %v28
    %v102 = vpop.f32.mrb[0].mxu0
    %v103 = vadd.f32 %v20, %v102
    %v104 = vpop.f32.mrb[0].mxu0
    %105 = vmatprep.mubr.f32.mxu0 0.0
    %106 = vmatmul.mubr.f32.gmra.mrb[0].mxu0 %v30
    %v107 = vpop.f32.mrb[0].mxu0
    %v108 = vadd.f32 %v25, %v107
    %v109 = vpop.f32.mrb[0].mxu0
    %110 = vdwg.mxu0
    %v111 = vmax.f32 %v103, 0.0
    %v112 = vmax.f32 %v108, 0.0
    %v113 = vand.u32 2147483647, %v103
    %v114 = vand.u32 2147483647, %v108
    %v115 = vsub.f32 0.0, %v113
    %v116 = vsub.f32 0.0, %v114
    %v117 = vmul.f32 %v115, 1.442695
    %v118 = vpow.pop %v117
    %v119 = vmul.f32 %v116, 1.442695
    %v120 = vpow.pop %v119
    %v121 = vadd.f32 %v118, 1.0
    %v122 = vlog2.pop %v121
    %v123 = vmul.f32 %v122, 0.6931472
    %v124 = vmul.f32 -0.5, %v118
    %v125 = vadd.f32 %v124, 1.0
    %v126 = vmul.f32 %v125, %v118
    %v127 = vand.u32 2147483647, %v118
    %vm128 = vcmp.lt.f32.partialorder %v127, 0.0004427343
    %v129 = vsel %vm128, %v126, %v123
    %v130 = vadd.f32 %v120, 1.0
    %v131 = vlog2.pop %v130
    %v132 = vmul.f32 %v131, 0.6931472
    %v133 = vmul.f32 -0.5, %v120
    %v134 = vadd.f32 %v133, 1.0
    %v135 = vmul.f32 %v134, %v120
    %v136 = vand.u32 2147483647, %v120
    %vm137 = vcmp.lt.f32.partialorder %v136, 0.0004427343
    %v138 = vsel %vm137, %v135, %v132
    %v139 = vadd.f32 %v111, %v129
    %v140 = vadd.f32 %v112, %v138
    %142 = vset.pattern.permute.xlu0 16
    %143 = vperm.xlu0 %142, %v15
    %v144 = vpop.permute.xlu0 %143
    %vm146 = vcmask 130048
    %v147 = vsel %vm146, %v15, 0
    %149 = vmatprep.subr.mxu0 0.0
    %150 = vmatpush1.msra.mxu0 %v139
    %151 = vmatprep.subr.mxu0 0.0
    %152 = vmatpush1.msra.mxu0 %v140
    %153 = vmatprep.subr.mxu0 0.0
    %154 = vmatpush1.msra.mxu0 0.0
    %155 = vmatprep.subr.mxu0 0.0
    %156 = vmatpush1.msra.mxu0 0.0
    %157 = vmatprep.subr.mxu0 0.0
    %158 = vmatpush1.msra.mxu0 0.0
    %159 = vmatprep.subr.mxu0 0.0
    %160 = vmatpush1.msra.mxu0 0.0
    %161 = vmatprep.subr.mxu0 0.0
    %162 = vmatpush1.msra.mxu0 0.0
    %163 = vmatprep.subr.mxu0 0.0
    %164 = vmatpush1.msra.mxu0 0.0
    %165 = vmatprep.subr.mxu0 0.0
    %166 = vmatpush1.msra.mxu0 0.0
    %167 = vmatprep.subr.mxu0 0.0
    %168 = vmatpush1.msra.mxu0 0.0
    %169 = vmatprep.subr.mxu0 0.0
    %170 = vmatpush1.msra.mxu0 0.0
    %171 = vmatprep.subr.mxu0 0.0
    %172 = vmatpush1.msra.mxu0 0.0
    %173 = vmatprep.subr.mxu0 0.0
    %174 = vmatpush1.msra.mxu0 0.0
    %175 = vmatprep.subr.mxu0 0.0
    %176 = vmatpush1.msra.mxu0 0.0
    %177 = vmatprep.subr.mxu0 0.0
    %178 = vmatpush1.msra.mxu0 0.0
    %179 = vmatprep.subr.mxu0 0.0
    %180 = vmatpush1.msra.mxu0 0.0
    %181 = vmatprep.subr.mxu0 0.0
    %182 = vmatpush1.msra.mxu0 0.0
    %183 = vmatprep.subr.mxu0 0.0
    %184 = vmatpush1.msra.mxu0 0.0
    %185 = vmatprep.subr.mxu0 0.0
    %186 = vmatpush1.msra.mxu0 0.0
    %187 = vmatprep.subr.mxu0 0.0
    %188 = vmatpush1.msra.mxu0 0.0
    %189 = vmatprep.subr.mxu0 0.0
    %190 = vmatpush1.msra.mxu0 0.0
    %191 = vmatprep.subr.mxu0 0.0
    %192 = vmatpush1.msra.mxu0 0.0
    %193 = vmatprep.subr.mxu0 0.0
    %194 = vmatpush1.msra.mxu0 0.0
    %195 = vmatprep.subr.mxu0 0.0
    %196 = vmatpush1.msra.mxu0 0.0
    %197 = vmatprep.subr.mxu0 0.0
    %198 = vmatpush1.msra.mxu0 0.0
    %199 = vmatprep.subr.mxu0 0.0
    %200 = vmatpush1.msra.mxu0 0.0
    %201 = vmatprep.subr.mxu0 0.0
    %202 = vmatpush1.msra.mxu0 0.0
    %203 = vmatprep.subr.mxu0 0.0
    %204 = vmatpush1.msra.mxu0 0.0
    %205 = vmatprep.subr.mxu0 0.0
    %206 = vmatpush1.msra.mxu0 0.0
    %207 = vmatprep.subr.mxu0 0.0
    %208 = vmatpush1.msra.mxu0 0.0
    %209 = vmatprep.subr.mxu0 0.0
    %210 = vmatpush1.msra.mxu0 0.0
    %211 = vmatprep.subr.mxu0 0.0
    %212 = vmatpush1.msra.mxu0 0.0
    %213 = vmatprep.mubr.f32.mxu0 0.0
    %214 = vmatmul.mubr.f32.gmra.mrb[0].mxu0 %v147
    %v215 = vpop.f32.mrb[0].mxu0
    %v216 = vadd.f32 %v144, %v215
    %v217 = vpop.f32.mrb[0].mxu0
    %218 = vdwg.mxu0
    %v219 = vmax.f32 %v216, 0.0
    %v220 = vand.u32 2147483647, %v216
    %v221 = vsub.f32 0.0, %v220
    %v222 = vmul.f32 %v221, 1.442695
    %v223 = vpow.pop %v222
    %v224 = vadd.f32 %v223, 1.0
    %v225 = vlog2.pop %v224
    %v226 = vmul.f32 %v225, 0.6931472
    %v227 = vmul.f32 -0.5, %v223
    %v228 = vadd.f32 %v227, 1.0
    %v229 = vmul.f32 %v228, %v223
    %v230 = vand.u32 2147483647, %v223
    %vm231 = vcmp.lt.f32.partialorder %v230, 0.0004427343
    %v232 = vsel %vm231, %v229, %v226
    %v233 = vadd.f32 %v219, %v232
    %235 = vset.pattern.permute.xlu0 8
    %236 = vperm.xlu0 %235, %v16
    %v237 = vpop.permute.xlu0 %236
    %vm239 = vcmask 64512
    %v240 = vsel %vm239, %v16, 0
    %242 = vmatprep.subr.mxu0 0.0
    %243 = vmatpush1.msra.mxu0 %v233
    %244 = vmatprep.subr.mxu0 0.0
    %245 = vmatpush1.msra.mxu0 0.0
    %246 = vmatprep.subr.mxu0 0.0
    %247 = vmatpush1.msra.mxu0 0.0
    %248 = vmatprep.subr.mxu0 0.0
    %249 = vmatpush1.msra.mxu0 0.0
    %250 = vmatprep.subr.mxu0 0.0
    %251 = vmatpush1.msra.mxu0 0.0
    %252 = vmatprep.subr.mxu0 0.0
    %253 = vmatpush1.msra.mxu0 0.0
    %254 = vmatprep.subr.mxu0 0.0
    %255 = vmatpush1.msra.mxu0 0.0
    %256 = vmatprep.subr.mxu0 0.0
    %257 = vmatpush1.msra.mxu0 0.0
    %258 = vmatprep.subr.mxu0 0.0
    %259 = vmatpush1.msra.mxu0 0.0
    %260 = vmatprep.subr.mxu0 0.0
    %261 = vmatpush1.msra.mxu0 0.0
    %262 = vmatprep.subr.mxu0 0.0
    %263 = vmatpush1.msra.mxu0 0.0
    %264 = vmatprep.subr.mxu0 0.0
    %265 = vmatpush1.msra.mxu0 0.0
    %266 = vmatprep.subr.mxu0 0.0
    %267 = vmatpush1.msra.mxu0 0.0
    %268 = vmatprep.subr.mxu0 0.0
    %269 = vmatpush1.msra.mxu0 0.0
    %270 = vmatprep.subr.mxu0 0.0
    %271 = vmatpush1.msra.mxu0 0.0
    %272 = vmatprep.subr.mxu0 0.0
    %273 = vmatpush1.msra.mxu0 0.0
    %274 = vmatprep.subr.mxu0 0.0
    %275 = vmatpush1.msra.mxu0 0.0
    %276 = vmatprep.subr.mxu0 0.0
    %277 = vmatpush1.msra.mxu0 0.0
    %278 = vmatprep.subr.mxu0 0.0
    %279 = vmatpush1.msra.mxu0 0.0
    %280 = vmatprep.subr.mxu0 0.0
    %281 = vmatpush1.msra.mxu0 0.0
    %282 = vmatprep.subr.mxu0 0.0
    %283 = vmatpush1.msra.mxu0 0.0
    %284 = vmatprep.subr.mxu0 0.0
    %285 = vmatpush1.msra.mxu0 0.0
    %286 = vmatprep.subr.mxu0 0.0
    %287 = vmatpush1.msra.mxu0 0.0
    %288 = vmatprep.subr.mxu0 0.0
    %289 = vmatpush1.msra.mxu0 0.0
    %290 = vmatprep.subr.mxu0 0.0
    %291 = vmatpush1.msra.mxu0 0.0
    %292 = vmatprep.subr.mxu0 0.0
    %293 = vmatpush1.msra.mxu0 0.0
    %294 = vmatprep.subr.mxu0 0.0
    %295 = vmatpush1.msra.mxu0 0.0
    %296 = vmatprep.subr.mxu0 0.0
    %297 = vmatpush1.msra.mxu0 0.0
    %298 = vmatprep.subr.mxu0 0.0
    %299 = vmatpush1.msra.mxu0 0.0
    %300 = vmatprep.subr.mxu0 0.0
    %301 = vmatpush1.msra.mxu0 0.0
    %302 = vmatprep.subr.mxu0 0.0
    %303 = vmatpush1.msra.mxu0 0.0
    %304 = vmatprep.subr.mxu0 0.0
    %305 = vmatpush1.msra.mxu0 0.0
    %306 = vmatprep.mubr.f32.mxu0 0.0
    %307 = vmatmul.mubr.f32.gmra.mrb[0].mxu0 %v240
    %v308 = vpop.f32.mrb[0].mxu0
    %v309 = vadd.f32 %v237, %v308
    %v310 = vpop.f32.mrb[0].mxu0
    %311 = vdwg.mxu0
    %v312 = vmul.f32 %v309, 0.5
    %v313 = vtanh.pop %v312
    %v314 = vand.u32 2147483647, %v313
    %315 = vst [vmem:[#allocation2] sm:$0x1] %v314
    // Predicated region
    $region10: #{tpu_custom_call.1} parent=1 // pred_check
      _
    $region11: #{tpu_custom_call.1} parent=1 // pred_check_branch
      %317 = sbr.rel (0) target = $region13
    $region12: #{tpu_custom_call.1} parent=1 // pred_region
      %s319 = ssub.s32 16, 16
      %320 = vsyncadd [#allocation3], %s319
      %s322 = sshll.u32 [#allocation2], 4
      %s323 = int_to_ptr.vmem [resolvable:$true] %s322
      %325 = dma.vmem_to_hbm [thread:$0]  %s323, 16, %s2, [#allocation3]
    $region13: #{tpu_custom_call.1} parent=1 // pred_fallthru
      _
    // Predicated region
    $region14: #{tpu_custom_call.1} parent=1 // pred_check
      _
    $region15: #{tpu_custom_call.1} parent=1 // pred_check_branch
      %327 = sbr.rel (0) target = $region17
    $region16: #{tpu_custom_call.1} parent=1 // pred_region
      %328 = dma.done [#allocation3], 16
    $region17: #{tpu_custom_call.1} parent=1 // pred_fallthru
      _
    %329 = vsyncpa [#allocation3], 1

</llo_original>
